<compile_context>
chip_gen: v7x
topology: tpu7x:2x2x1
jax: 0.10.0
libtpu: 0.0.40
codegen_flags: <defaults>
</compile_context>

<pallas_src>
import jax
import jax.numpy as jnp
from jax.experimental import pallas as pl
from jax.experimental.pallas import tpu as pltpu

_LANE = 128
_SUB = 8
_BLOCK_BUDGET = 4 * 2**20       # target bytes per conf block (double-buffered)


def _round_up(x, m):
    return -(-x // m) * m


def _lse_block_kernel(conf_ref, lse_ref):
    """Per-block log-sum-exp over every axis except axis 0 (the batch rows)."""
    x = conf_ref[...].astype(jnp.float32)
    if x.ndim == 3:                         # (TB, TR, 128) sublane-packed layout
        m = jnp.max(jnp.max(x, axis=2), axis=1, keepdims=True)         # (TB, 1)
        e = jnp.exp(x - m[:, :, None])
        s = jnp.sum(jnp.sum(e, axis=2), axis=1, keepdims=True)         # (TB, 1)
    else:                                   # (TB, TL) lane-dense layout
        m = jnp.max(x, axis=1, keepdims=True)                          # (TB, 1)
        e = jnp.exp(x - m)
        s = jnp.sum(e, axis=1, keepdims=True)                          # (TB, 1)
    lse_ref[...] = (m + jnp.log(s))[None, :, :]                        # (1, TB, 1)


class LossPallas:
    """JAX/Pallas port of the PyTorch `Loss` module's forward (loss path)."""

    def __init__(self, off_weight, anchors, input_size):
        self.img_dim = float(input_size)
        self.off_weight = float(off_weight)
        a = jnp.asarray([list(an) for an in anchors], dtype=jnp.float32).reshape(3, 3, 2)
        self.anchor_groups = [a[i] for i in range(3)]

    # ---- per-scale target assignment (mirrors _build_target, tiny JAX glue) ----
    def _per_scale_targets(self, targets, grid_sizes):
        tn = targets.astype(jnp.float32) / self.img_dim      # (B, 4) normalized x1y1x2y2
        res = []
        for anchors, nG in zip(self.anchor_groups, grid_sizes):
            stride = self.img_dim / nG
            sa = anchors / stride                             # (3, 2) scaled anchors
            t = tn * nG
            gxy = (t[:, :2] + t[:, 2:]) / 2.0
            gwh = jnp.maximum(t[:, 2:] - t[:, :2], 0.0)       # clamp degenerate boxes
            w1, h1 = sa[:, 0:1], sa[:, 1:2]                   # (3, 1)
            w2, h2 = gwh[:, 0][None, :], gwh[:, 1][None, :]   # (1, B)
            inter = jnp.minimum(w1, w2) * jnp.minimum(h1, h2)
            union = w1 * h1 + 1e-16 + w2 * h2 - inter
            ious = inter / union                              # (3, B)
            best_iou = jnp.max(ious, axis=0)                  # (B,)
            best_n = jnp.argmax(ious, axis=0).astype(jnp.int32)
            gx, gy = gxy[:, 0], gxy[:, 1]
            gw, gh = gwh[:, 0], gwh[:, 1]
            gi = jnp.clip(jnp.floor(gx).astype(jnp.int32), 0, nG - 1)
            gj = jnp.clip(jnp.floor(gy).astype(jnp.int32), 0, nG - 1)
            tx = gx - jnp.floor(gx)
            ty = gy - jnp.floor(gy)
            tw = jnp.log(gw / sa[best_n, 0] + 1e-16)
            th = jnp.log(gh / sa[best_n, 1] + 1e-16)
            tvals = jnp.stack([tx, ty, tw, th], axis=1)       # (B, 4)
            res.append((best_iou, best_n, gj, gi, tvals))
        return res

    # ---- tiny (B, 5) gather straight from one scale's NCHW conv output ----
    @staticmethod
    def _gather_vals(o, best_n, gj, gi):
        B = o.shape[0]
        b = jnp.arange(B, dtype=jnp.int32)
        ch = best_n[:, None] * 5 + jnp.arange(5, dtype=jnp.int32)[None, :]   # (B, 5)
        return o[b[:, None], ch, gj[:, None], gi[:, None]].astype(jnp.float32)

    def __call__(self, outs, targets):
        # TODO(synk): the `targets is None` inference path (decoded pred boxes with
        # grid offsets / exp(w)*anchor) is not needed for the loss and is not ported.
        grid_sizes = [int(o.shape[2]) for o in outs]
        B = int(outs[0].shape[0])

        # ---- target assignment + direct per-scale gathers (no attribute slabs) ----
        per_scale = self._per_scale_targets(targets, grid_sizes)
        best_ious = jnp.stack([p[0] for p in per_scale], axis=1)              # (B, S)
        scale_idx = jnp.argmax(best_ious, axis=1)                             # (B,)
        vals = jnp.stack([self._gather_vals(o, bn, gj, gi)
                          for o, (_, bn, gj, gi, _) in zip(outs, per_scale)],
                         axis=1)                                              # (B, S, 5)
        tvals_all = jnp.stack([p[4] for p in per_scale], axis=1)              # (B, S, 4)
        chosen_vals = jnp.take_along_axis(vals, scale_idx[:, None, None], axis=1)[:, 0]
        tvals = jnp.take_along_axis(tvals_all, scale_idx[:, None, None], axis=1)[:, 0]
        tgt_logit = chosen_vals[:, 4]                                         # (B,)
        pred_off = chosen_vals[:, :4]                                         # (B, 4)

        # ---- conf slab (CE logits), lane-dense, padding fused into the concat ----
        conf_parts = [o[:, 4::5, :, :].reshape(B, -1) for o in outs]          # attr 4 per anchor
        L = sum(int(p.shape[1]) for p in conf_parts)
        cdtype = conf_parts[0].dtype
        itemsize = jnp.dtype(cdtype).itemsize
        pad_val = float(jnp.finfo(cdtype).min) / 2.0          # exp(pad-max) underflows to 0
        lanes = -(-L // _LANE)

        if B >= _SUB:
            # 2D path: (Bp, Lp) slab, reduce over the lane axis in-kernel (no relayout).
            TB = 8
            for cand in (32, 16):
                if B % cand == 0:
                    TB = cand
                    break
            Bp = _round_up(B, TB)
            nbb = Bp // TB
            cap_lanes = max(1, _BLOCK_BUDGET // (TB * _LANE * itemsize))
            nlb = -(-lanes // cap_lanes)
            if nbb * nlb == 1 and lanes >= 16:
                nlb = 2                    # give the 2nd TensorCore (v7x) a block
            TL = -(-lanes // nlb) * _LANE
            Lp = nlb * TL
            parts = list(conf_parts)
            if Lp > L:
                parts.append(jnp.full((B, Lp - L), pad_val, cdtype))
            conf_in = jnp.concatenate(parts, axis=1)                          # (B, Lp)
            if Bp > B:
                conf_in = jnp.concatenate(
                    [conf_in, jnp.full((Bp - B, Lp), pad_val, cdtype)], axis=0)
            conf_spec = pl.BlockSpec((TB, TL), lambda bi, li: (bi, li))
            blk_bytes = TB * TL * itemsize
        else:
            # Tiny-batch 3D path: reshape to (B, R, 128) so sublanes are filled.
            TB, Bp, nbb = B, B, 1
            rows = _round_up(lanes, _SUB)
            cap_rows = max(_SUB, (_BLOCK_BUDGET // (B * _LANE * itemsize)) // _SUB * _SUB)
            nlb = -(-rows // cap_rows)
            if nlb == 1 and rows >= 16:
                nlb = 2                    # dual-TC split for small-batch / larger L
            TR = _round_up(-(-rows // nlb), _SUB)
            R = nlb * TR
            Lp = R * _LANE
            parts = list(conf_parts)
            if Lp > L:
                parts.append(jnp.full((B, Lp - L), pad_val, cdtype))
            conf_in = jnp.concatenate(parts, axis=1).reshape(B, R, _LANE)
            conf_spec = pl.BlockSpec((B, TR, _LANE), lambda bi, li: (0, li, 0))
            blk_bytes = B * TR * _LANE * itemsize

        out_spec = pl.BlockSpec((1, TB, 1), lambda bi, li: (li, bi, 0))
        vmem_limit = int(min(32 * 2**20, max(4 * 2**20, 4 * blk_bytes)))
        conf_bytes = int(conf_in.size) * itemsize
        cost = pl.CostEstimate(flops=3 * int(conf_in.size),
                               transcendentals=int(conf_in.size),
                               bytes_accessed=conf_bytes + nlb * Bp * 4)

        lse_parts = pl.pallas_call(
            _lse_block_kernel,
            out_shape=jax.ShapeDtypeStruct((nlb, Bp, 1), jnp.float32),
            grid_spec=pltpu.PrefetchScalarGridSpec(
                num_scalar_prefetch=0,
                grid=(nbb, nlb),
                in_specs=[conf_spec],
                out_specs=out_spec),
            compiler_params=pltpu.CompilerParams(
                dimension_semantics=("parallel", "parallel"),
                vmem_limit_bytes=vmem_limit),
            cost_estimate=cost,
        )(conf_in)

        # ---- O(B) epilogue in plain JAX (pad rows sliced away) ----
        part = lse_parts[:, :B, 0]                                 # (nlb, B)
        lse = part[0] if nlb == 1 else jax.nn.logsumexp(part, axis=0)
        loss_conf = jnp.mean(lse - tgt_logit)                      # CE, mean over batch
        ps = jnp.clip(jax.nn.sigmoid(pred_off[:, :2]), 1e-4, 1.0 - 1e-4)   # sigmoid only x, y
        pp = jnp.concatenate([ps, pred_off[:, 2:]], axis=1)
        off_loss = jnp.mean(jnp.sum((pp - tvals) ** 2, axis=1))
        w_off = self.off_weight * off_loss
        loss = w_off + loss_conf
        # match PyTorch: three tensors of shape (1,)
        return loss.reshape(1), loss_conf.reshape(1), w_off.reshape(1)


def _reference_loss(outs, targets, mod):
    """Dense pure-JAX reference mirroring the PyTorch math (for a sanity check)."""
    B = outs[0].shape[0]
    grid_sizes = [int(o.shape[2]) for o in outs]
    conf = jnp.concatenate([o[:, 4::5, :, :].reshape(B, -1) for o in outs],
                           axis=1).astype(jnp.float32)
    per_scale = mod._per_scale_targets(targets, grid_sizes)
    best_ious = jnp.stack([p[0] for p in per_scale], axis=1)
    scale_idx = jnp.argmax(best_ious, axis=1)
    flats, tvs = [], []
    off = 0
    for (_, bn, gj, gi, tvals), nG in zip(per_scale, grid_sizes):
        flats.append(off + bn * (nG * nG) + gj * nG + gi)
        tvs.append(tvals)
        off += 3 * nG * nG
    flats = jnp.stack(flats, axis=1)
    tvs = jnp.stack(tvs, axis=1)
    chosen_flat = jnp.take_along_axis(flats, scale_idx[:, None], axis=1)[:, 0]
    tvals = jnp.take_along_axis(tvs, scale_idx[:, None, None], axis=1)[:, 0]

    lse = jax.nn.logsumexp(conf, axis=1)
    tgt = jnp.take_along_axis(conf, chosen_flat[:, None], axis=1)[:, 0]
    loss_conf = jnp.mean(lse - tgt)

    def sg(v):
        return jnp.clip(jax.nn.sigmoid(v), 1e-4, 1.0 - 1e-4)

    preds = []
    for c in range(4):
        slab = jnp.concatenate([o[:, c::5, :, :].reshape(B, -1) for o in outs],
                               axis=1).astype(jnp.float32)
        preds.append(jnp.take_along_axis(slab, chosen_flat[:, None], axis=1)[:, 0])
    p = jnp.stack(preds, axis=1)
    d = ((sg(p[:, 0]) - tvals[:, 0]) ** 2 + (sg(p[:, 1]) - tvals[:, 1]) ** 2
         + (p[:, 2] - tvals[:, 2]) ** 2 + (p[:, 3] - tvals[:, 3]) ** 2)
    off_l = jnp.mean(d)
    w_off = mod.off_weight * off_l
    return w_off + loss_conf, loss_conf, w_off


if __name__ == "__main__":
    key = jax.random.PRNGKey(0)
    img_dim = 64
    anchors = [(30, 30), (40, 50), (60, 45),  # group 0 (coarse grid)
               (15, 18), (20, 24), (28, 30),  # group 1
               (6, 8), (10, 12), (14, 10)]    # group 2 (fine grid)
    loss_mod = LossPallas(off_weight=2.0, anchors=anchors, input_size=img_dim)

    # three structural variants: tiny-batch 3D path, batch>=8 2D path,
    # and the forced 2-way L split (dual-TC on v7x)
    cases = [
        (2, (4, 8, 16)),
        (8, (4, 8, 16)),
        (2, (8, 16, 32)),
    ]
    all_ok = True
    for ci, (B, grids) in enumerate(cases):
        keys = jax.random.split(jax.random.fold_in(key, ci), len(grids) + 1)
        outs = [jax.random.normal(keys[i], (B, 15, g, g), dtype=jnp.float32)
                for i, g in enumerate(grids)]
        xy1 = jax.random.uniform(keys[-1], (B, 2), minval=2.0, maxval=20.0)
        wh = jax.random.uniform(jax.random.fold_in(keys[-1], 1), (B, 2),
                                minval=8.0, maxval=36.0)
        targets = jnp.concatenate([xy1, jnp.minimum(xy1 + wh, img_dim - 1.0)], axis=1)

        loss, loss_conf, off_loss = loss_mod(outs, targets)
        jax.block_until_ready((loss, loss_conf, off_loss))

        rl, rc, ro = _reference_loss(outs, targets, loss_mod)
        ok = (bool(jnp.allclose(loss[0], rl, rtol=2e-4, atol=1e-5))
              and bool(jnp.allclose(loss_conf[0], rc, rtol=2e-4, atol=1e-5))
              and bool(jnp.allclose(off_loss[0], ro, rtol=2e-4, atol=1e-5)))
        assert ok, (ci, loss, loss_conf, off_loss, rl, rc, ro)
        all_ok = all_ok and ok

    if all_ok:
        print("KERNEL_OK")
</pallas_src>

<mosaic_0001>
module attributes {stable_mosaic.version = 11 : i64} {
  func.func @_lse_block_kernel(%arg0: i32, %arg1: i32, %arg2: memref<2x8x128xf32, #tpu.memory_space<vmem>>, %arg3: memref<1x2x1xf32, #tpu.memory_space<vmem>>) attributes {dimension_semantics = [#tpu.dimension_semantics<parallel>, #tpu.dimension_semantics<parallel>], iteration_bounds = array<i64: 1, 1>, scalar_prefetch = 0 : i64, scratch_operands = 0 : i64, tpu.core_type = #tpu.core_type<tc>, window_params = [{transform_indices = @transform_0, window_bounds = array<i64: 2, 8, 128>}, {transform_indices = @transform_1, window_bounds = array<i64: 1, 2, 1>}]} {
    %c0 = arith.constant 0 : index
    %c0_0 = arith.constant 0 : index
    %c0_1 = arith.constant 0 : index
    %0 = vector.load %arg2[%c0, %c0_0, %c0_1] : memref<2x8x128xf32, #tpu.memory_space<vmem>>, vector<2x8x128xf32>
    %cst = arith.constant dense<0xFF800000> : vector<2x8xf32>
    %1 = vector.multi_reduction <maximumf>, %0, %cst [2] : vector<2x8x128xf32> to vector<2x8xf32>
    %cst_2 = arith.constant dense<0xFF800000> : vector<2xf32>
    %2 = vector.multi_reduction <maximumf>, %1, %cst_2 [1] : vector<2x8xf32> to vector<2xf32>
    %3 = vector.shape_cast %2 : vector<2xf32> to vector<2x1xf32>
    %4 = vector.shape_cast %3 : vector<2x1xf32> to vector<2x1x1xf32>
    %5 = vector.broadcast %4 : vector<2x1x1xf32> to vector<2x8x128xf32>
    %6 = arith.subf %0, %5 : vector<2x8x128xf32>
    %7 = math.exp %6 : vector<2x8x128xf32>
    %cst_3 = arith.constant dense<0.000000e+00> : vector<2x8xf32>
    %8 = vector.multi_reduction <add>, %7, %cst_3 [2] : vector<2x8x128xf32> to vector<2x8xf32>
    %cst_4 = arith.constant dense<0.000000e+00> : vector<2xf32>
    %9 = vector.multi_reduction <add>, %8, %cst_4 [1] : vector<2x8xf32> to vector<2xf32>
    %10 = vector.shape_cast %9 : vector<2xf32> to vector<2x1xf32>
    %11 = math.log %10 : vector<2x1xf32>
    %12 = arith.addf %3, %11 : vector<2x1xf32>
    %13 = vector.shape_cast %12 : vector<2x1xf32> to vector<1x2x1xf32>
    %c0_5 = arith.constant 0 : index
    %c0_6 = arith.constant 0 : index
    %c0_7 = arith.constant 0 : index
    %14 = vector.load %arg3[%c0_5, %c0_6, %c0_7] : memref<1x2x1xf32, #tpu.memory_space<vmem>>, vector<1x2x1xf32>
    tpu.vector_store %arg3[%c0_5, %c0_6, %c0_7], %13 {strides = array<i32>} : memref<1x2x1xf32, #tpu.memory_space<vmem>>, vector<1x2x1xf32>,
    return
  }
  func.func @transform_0(%arg0: i32, %arg1: i32) -> (i32, i32, i32) {
    %c0_i32 = arith.constant 0 : i32
    %c0_i32_0 = arith.constant 0 : i32
    %c0_i32_1 = arith.constant 0 : i32
    return %c0_i32, %arg1, %c0_i32_0 : i32, i32, i32
  }
  func.func @transform_1(%arg0: i32, %arg1: i32) -> (i32, i32, i32) {
    %c0_i32 = arith.constant 0 : i32
    %c0_i32_0 = arith.constant 0 : i32
    return %arg1, %arg0, %c0_i32 : i32, i32, i32
  }
}

</mosaic_0001>

<llo_original>
// kernel: tpu_custom_call.1
$region0: #{tpu_custom_call.1}
  #allocation0 [shape = 'u32[]', space=smem, size = 0x4, offset = 0x4, fixed_abs, tag = 'smem constant byte address 0x4 - core index']
  #allocation1 [shape = 'u32[144,128]{1,0:T(1,128)}', space=vmem, size = 0x12000, scoped, tag = 'internal scratch']
  %s0 = inlined_call_operand.hbm [shape: f32[2,8,128], index: 0, kind: input, shape index: {}]
  %s1 = inlined_call_operand.vmem [shape: f32[1,2,1], index: 1, kind: output, shape index: {}]
  %s2 = sld [smem:[#allocation0]]
  $region18: #{tpu_custom_call.1} parent=0
    _
  %s4 = ssub.s32 1, %s2
  %s5 = scalar_select 0, %s4, %s2
  $region1: #{tpu_custom_call.1} parent=0
    #allocation2 [shape = 'u8[8192]{0}', space=vmem, size = 0x2000, scoped, tag = 'input window, operand 0, single buffered']
    #allocation3 [shape = 's32[1]{0}', space=sflag, size = 0x4, scoped, tag = 'scoped memory for tpu_custom_call.1']
    %6 = vsyncpa [#allocation3], 0
    // Predicated region
    $region2: #{tpu_custom_call.1} parent=1 // pred_check
      _
    $region3: #{tpu_custom_call.1} parent=1 // pred_check_branch
      %8 = sbr.rel (0) target = $region5
    $region4: #{tpu_custom_call.1} parent=1 // pred_region
      %s10 = ssub.s32 256, 256
      %11 = vsyncadd [#allocation3], %s10
      %s12 = sshll.u32 [#allocation2], 4
      %s13 = int_to_ptr.vmem [resolvable:$true] %s12
      %18 = dma.hbm_to_vmem [thread:$0]  %s0, 256, %s13, [#allocation3], 128, 128, 8
    $region5: #{tpu_custom_call.1} parent=1 // pred_fallthru
      _
    // Predicated region
    $region6: #{tpu_custom_call.1} parent=1 // pred_check
      _
    $region7: #{tpu_custom_call.1} parent=1 // pred_check_branch
      %20 = sbr.rel (0) target = $region9
    $region8: #{tpu_custom_call.1} parent=1 // pred_region
      %21 = dma.done [#allocation3], 256
    $region9: #{tpu_custom_call.1} parent=1 // pred_fallthru
      _
    %v22 = vld [vmem:[#allocation2] sm:$0xff]
    %v23 = vld [vmem:[#allocation2 + $0x8] sm:$0xff]
    %24 = vmax.xlane.f32.xlu0 %v22
    %v25 = vpop.xlane.xlu0 %24
    %26 = vmax.xlane.f32.xlu0 %v23
    %v27 = vpop.xlane.xlu0 %26
    %v30 = vlaneseq
    %v31 = vand.u32 %v30, 127
    %v32 = vlaneseq
    %v33 = vshrl.u32 %v32, 7
    %v34 = vsub.s32 %v31, %v33
    %v35 = vrot.slane %v25, %v34
    %v36 = vlaneseq
    %v37 = vshrl.u32 %v36, 7
    %v38 = vsub.s32 %v31, %v37
    %v39 = vrot.slane %v27, %v38
    %vm40 = vcmask 1041409
    %v41 = vsel %vm40, %v39, %v35
    %vm43 = vcmask 58368
    %v44 = vsel %vm43, %v41, -inf
    %45 = vmax.xlane.f32.xlu0 %v44
    %v46 = vpop.xlane.xlu0 %45
    %v48 = vlaneseq
    %v49 = vshrl.u32 %v48, 7
    %v50 = vsub.s32 0, %v49
    %v51 = vrot.slane %v46, %v50
    %v52 = vlaneseq
    %v53 = vshrl.u32 %v52, 7
    %v54 = vsub.s32 1, %v53
    %v55 = vrot.slane %v46, %v54
    %v58 = vsub.f32 %v22, %v51
    %v59 = vsub.f32 %v23, %v55
    %v60 = vmul.f32 %v58, 1.442695
    %v61 = vpow.pop %v60
    %v62 = vmul.f32 %v59, 1.442695
    %v63 = vpow.pop %v62
    %64 = vadd.xlane.f32.xlu0 %v61
    %v65 = vpop.xlane.xlu0 %64
    %66 = vadd.xlane.f32.xlu0 %v63
    %v67 = vpop.xlane.xlu0 %66
    %v70 = vlaneseq
    %v71 = vshrl.u32 %v70, 7
    %v72 = vsub.s32 %v31, %v71
    %v73 = vrot.slane %v65, %v72
    %v74 = vlaneseq
    %v75 = vshrl.u32 %v74, 7
    %v76 = vsub.s32 %v31, %v75
    %v77 = vrot.slane %v67, %v76
    %v78 = vsel %vm40, %v77, %v73
    %v80 = vsel %vm43, %v78, 0.0
    %81 = vadd.xlane.f32.xlu0 %v80
    %v82 = vpop.xlane.xlu0 %81
    %v83 = vlog2.pop %v82
    %v84 = vmul.f32 %v83, 0.6931472
    %v85 = vadd.f32 %v46, %v84
    %vm86 = vcmask 1024
    %87 = vst.msk [vmem:[%s1] sm:$0x3] %vm86, %v85
    // Predicated region
    $region10: #{tpu_custom_call.1} parent=1 // pred_check
      _
    $region11: #{tpu_custom_call.1} parent=1 // pred_check_branch
      %89 = sbr.rel (0) target = $region13
    $region12: #{tpu_custom_call.1} parent=1 // pred_region
      _
    $region13: #{tpu_custom_call.1} parent=1 // pred_fallthru
      _
    // Predicated region
    $region14: #{tpu_custom_call.1} parent=1 // pred_check
      _
    $region15: #{tpu_custom_call.1} parent=1 // pred_check_branch
      %91 = sbr.rel (0) target = $region17
    $region16: #{tpu_custom_call.1} parent=1 // pred_region
      _
    $region17: #{tpu_custom_call.1} parent=1 // pred_fallthru
      _
    %92 = vsyncpa [#allocation3], 1

</llo_original>
